<compile_context>
chip_gen: v6e
topology: v6e:2x2x1
jax: 0.10.0
libtpu: 0.0.40
codegen_flags: <defaults>
</compile_context>

<pallas_src>
import functools

import numpy as np
import jax
import jax.numpy as jnp
from jax.experimental import pallas as pl
from jax.experimental.pallas import tpu as pltpu


def _pick_row_tile(mh, lane_width, max_tile_elems=1 << 18):
    """Largest divisor TMh of mh keeping the (TMh, lane_width) f32 accumulator small.
    Prefers the full extent (single tile); otherwise multiples of 8 so the output block
    keeps (8,128)-aligned sublanes."""
    if mh * lane_width <= max_tile_elems:
        return mh
    for tmh in range(mh - 1, 0, -1):
        if mh % tmh == 0 and tmh % 8 == 0 and tmh * lane_width <= max_tile_elems:
            return tmh
    return mh


def _phase_axis_params(s, k, crop):
    """Static per-output-residue parameters along one spatial axis.
    For cropped-output residue c0 (output index = m*s + c0):
      r  = (c0 + crop) % s   kernel-tap residue feeding this phase
      q0 = (c0 + crop) // s  input offset
      T  = #taps of the phase = ceil((k - r)/s)  (0 if r >= k, i.e. bias-only phase)
    Union tap window: tap a in [0, Tu) reads input index m + base + a and uses kernel tap
    kh = (q0 - base - a)*s + r when 0 <= q0 - base - a < T (zero weight otherwise)."""
    q0, T = [], []
    for c0 in range(s):
        r = (c0 + crop) % s
        q0.append((c0 + crop) // s)
        T.append((-(-(k - r) // s)) if r < k else 0)
    valid = [i for i in range(s) if T[i] > 0]
    base = min(q0[i] - T[i] + 1 for i in valid)
    tu = max(q0[i] for i in valid) - base + 1
    return q0, T, base, tu


def _make_kernel(Tu_h, TMh, Wd, PCM, row_off, col_off, single_tile):
    """out[m, (phase, cout, col)] = bias + sum_a x[r0 + a + m, col_off:col_off+Wd] @ W_band[a]
    with r0 = row_tile*TMh + row_off and f32 accumulation.  Static params in the closure."""

    def kernel(x_ref, w_ref, b_ref, o_ref):
        # x_ref: (Hz, Wz*Cin)     padded, channel-folded image of one batch element
        # w_ref: (Tu_h, Wd, PCM)  banded (Toeplitz) stacked phase weights
        # b_ref: (1, PCM)         bias broadcast over phases / output columns (f32)
        # o_ref: (TMh, PCM)       lane-dense output tile (PCM is a multiple of 128 here)
        if single_tile:
            r0 = row_off
        else:
            r0 = pl.multiple_of(pl.program_id(1) * TMh, TMh) + row_off
        acc = jnp.broadcast_to(b_ref[...], (TMh, PCM))            # f32 accumulator seed
        for a in range(Tu_h):                                     # Tu_h is tiny (<= ceil(K/s)+1)
            xs = x_ref[pl.ds(r0 + a, TMh), pl.ds(col_off, Wd)]    # one lane-dense load / tap row
            acc = acc + jnp.dot(xs, w_ref[a], preferred_element_type=jnp.float32)
        o_ref[...] = acc.astype(o_ref.dtype)

    return kernel


@functools.partial(jax.jit, static_argnums=(3,))
def circular_conv_transpose2d(x, weight, bias, stride):
    """x: (N, Cin, H, W) NCHW.  weight: (Cin, Cout, Kh, Kw) (torch ConvTranspose2d layout).
    bias: (Cout,).  stride: (sh, sw).  Returns NCHW output matching the PyTorch module."""
    N, Cin, H, W = x.shape
    _, Cout, Kh, Kw = weight.shape
    sh, sw = stride
    # integer form of the module's  int(0.5 + (K-1)/(2*s))  — exact, no float rounding
    pad_h = (Kh - 1 + sh) // (2 * sh)
    pad_w = (Kw - 1 + sw) // (2 * sw)
    crop_h, crop_w = (sh + 1) * pad_h, (sw + 1) * pad_w
    Hp, Wp = H + 2 * pad_h, W + 2 * pad_w
    Ho = (Hp - 1) * sh + Kh - 2 * crop_h
    Wo = (Wp - 1) * sw + Kw - 2 * crop_w
    out_dtype = x.dtype

    # ---- static polyphase / union-window geometry --------------------------------------
    q0h, Th, base_h, Tu_h = _phase_axis_params(sh, Kh, crop_h)
    q0w, Tw, base_w, Tu_w = _phase_axis_params(sw, Kw, crop_w)
    Mh, Mw = -(-Ho // sh), -(-Wo // sw)      # unified per-phase output extents
    P = sh * sw
    PCM = P * Cout * Mw                      # lane width of the kernel output
    Wd = (Mw + Tu_w - 1) * Cin               # lane width of one tap-row input slice

    # extra zero padding so every union-window read stays in bounds
    pt = max(0, -base_h)
    pb = max(0, (Mh - 1 + base_h + Tu_h - 1) - (Hp - 1))
    pL = max(0, -base_w)
    pR = max(0, (Mw - 1 + base_w + Tu_w - 1) - (Wp - 1))

    # ---- input: circular pad (module semantics), union zero pad, fold (W, Cin) ---------
    xp = jnp.pad(x, ((0, 0), (0, 0), (pad_h, pad_h), (pad_w, pad_w)), mode='wrap')
    if pt or pb or pL or pR:
        xp = jnp.pad(xp, ((0, 0), (0, 0), (pt, pb), (pL, pR)))
    Hz, Wz = Hp + pt + pb, Wp + pL + pR
    # single layout change: NCHW -> (N, Hz, Wz*Cin); minor axis is Wz*Cin (lane-dense)
    x_f = jnp.transpose(xp, (0, 2, 3, 1)).reshape(N, Hz, Wz * Cin)
    row_off = base_h + pt
    col_off = (base_w + pL) * Cin

    # ---- stacked, flipped, zero-padded phase weights  Wu[p, a, b, co, ci] ---------------
    # p enumerates OUTPUT residues (c0h, c0w).  Invalid taps / degenerate (stride>kernel)
    # phases are zero, so bias-only phases fall out for free.
    phase_blocks = []
    for c0h in range(sh):
        rh = (c0h + crop_h) % sh
        for c0w in range(sw):
            rw = (c0w + crop_w) % sw
            rows = []
            for a in range(Tu_h):
                t = q0h[c0h] - base_h - a
                row_ok = 0 <= t < Th[c0h]
                cols = []
                for b in range(Tu_w):
                    u = q0w[c0w] - base_w - b
                    if row_ok and 0 <= u < Tw[c0w]:
                        cols.append(weight[:, :, t * sh + rh, u * sw + rw].T)  # (Cout, Cin)
                    else:
                        cols.append(jnp.zeros((Cout, Cin), weight.dtype))
                rows.append(jnp.stack(cols, axis=0))       # (Tu_w, Cout, Cin)
            phase_blocks.append(jnp.stack(rows, axis=0))    # (Tu_h, Tu_w, Cout, Cin)
    Wu = jnp.stack(phase_blocks, axis=0)                     # (P, Tu_h, Tu_w, Cout, Cin)

    # (Tu_h, Tu_w*Cin, P*Cout): contraction-minor x stacked-output blocks
    Wblk = jnp.transpose(Wu, (1, 2, 4, 0, 3)).reshape(Tu_h, Tu_w * Cin, P * Cout)

    # Banded ("Toeplitz") expansion over output columns, so ONE matmul per tap row serves
    # every output column and every phase:
    #   W_band[a, j, q*Mw + l] = Wblk[a, j - l*Cin, q]  when 0 <= j - l*Cin < Tu_w*Cin
    jidx = np.arange(Wd)[:, None] - np.arange(Mw)[None, :] * Cin              # (Wd, Mw)
    band_ok = jnp.asarray((jidx >= 0) & (jidx < Tu_w * Cin))
    gath = jnp.take(Wblk, jnp.asarray(np.clip(jidx, 0, Tu_w * Cin - 1)), axis=1)
    W_band = jnp.where(band_ok[None, :, :, None], gath, 0)                    # (Tu_h, Wd, Mw, P*Cout)
    W_band = jnp.transpose(W_band, (0, 1, 3, 2)).reshape(Tu_h, Wd, PCM).astype(x.dtype)

    # bias broadcast over (phase, cout, col) in the same lane order as the output tile
    b_row = jnp.broadcast_to(bias.reshape(1, Cout, 1), (P, Cout, Mw))
    b_row = b_row.reshape(1, PCM).astype(jnp.float32)

    # ---- the single fused kernel --------------------------------------------------------
    TMh = _pick_row_tile(Mh, PCM)
    n_t = Mh // TMh
    kernel = _make_kernel(Tu_h, TMh, Wd, PCM, row_off, col_off, single_tile=(n_t == 1))

    out = pl.pallas_call(
        kernel,
        out_shape=jax.ShapeDtypeStruct((N, Mh, PCM), out_dtype),
        grid=(N, n_t),
        in_specs=[
            # Full padded image of one batch element; block index changes only with the
            # outer batch axis, so it is DMA'd N times total (a few KiB here).  For very
            # large H, switch this to a manual-DMA row window (memory_space=pl.ANY +
            # pltpu.make_async_copy) to bound VMEM on v7x's 64 MiB.
            pl.BlockSpec((None, Hz, Wz * Cin), lambda n, t: (n, 0, 0)),
            # Banded weights + bias: constant block index -> fetched once, stay resident.
            pl.BlockSpec((Tu_h, Wd, PCM), lambda n, t: (0, 0, 0)),
            pl.BlockSpec((1, PCM), lambda n, t: (0, 0)),
        ],
        out_specs=pl.BlockSpec((None, TMh, PCM), lambda n, t: (n, t, 0)),
        compiler_params=pltpu.CompilerParams(
            dimension_semantics=("parallel", "parallel"),
            vmem_limit_bytes=32 * 1024 * 1024),
    )(x_f, W_band, b_row)

    # un-interleave phases + crop: one transpose/reshape, fused with the slice by XLA
    out = out.reshape(N, Mh, sh, sw, Cout, Mw)
    out = jnp.transpose(out, (0, 4, 1, 2, 5, 3)).reshape(N, Cout, Mh * sh, Mw * sw)
    return out[:, :, :Ho, :Wo]


def _reference_forward(x, weight, bias, stride):
    """Pure-JAX reference mirroring the PyTorch module (scatter form of conv_transpose)."""
    N, Cin, H, W = x.shape
    _, Cout, Kh, Kw = weight.shape
    sh, sw = stride
    pad_h = int(0.5 + (Kh - 1.0) / (2.0 * sh))
    pad_w = int(0.5 + (Kw - 1.0) / (2.0 * sw))
    xp = jnp.pad(x, ((0, 0), (0, 0), (pad_h, pad_h), (pad_w, pad_w)), mode='wrap')
    Hp, Wp = xp.shape[2], xp.shape[3]
    Ho = (Hp - 1) * sh + Kh
    Wo = (Wp - 1) * sw + Kw
    out = jnp.broadcast_to(bias[None, :, None, None], (N, Cout, Ho, Wo)).astype(jnp.float32)
    for kh in range(Kh):
        for kw in range(Kw):
            contrib = jnp.einsum('nchw,cd->ndhw', xp, weight[:, :, kh, kw])
            out = out.at[:, :, kh:kh + (Hp - 1) * sh + 1:sh,
                         kw:kw + (Wp - 1) * sw + 1:sw].add(contrib)
    crop_h = (sh + 1) * pad_h
    crop_w = (sw + 1) * pad_w
    return out[:, :, crop_h:Ho - crop_h, crop_w:Wo - crop_w]


if __name__ == "__main__":
    key = jax.random.PRNGKey(0)

    configs = [
        # (in_channels, out_channels, kernel_size, stride)
        (4, 8, (3, 3), (1, 1)),   # module defaults: same-size output
        (4, 6, (4, 4), (2, 2)),   # 2x upsampling variant
        (4, 6, (3, 3), (2, 2)),   # uneven per-phase taps + odd output size
    ]

    for (cin, cout, ksz, stride) in configs:
        k1, k2, k3, key = jax.random.split(key, 4)
        x = jax.random.normal(k1, (2, cin, 16, 16), dtype=jnp.float32)
        # torch ConvTranspose2d weight layout: (in_channels, out_channels, Kh, Kw)
        weight = 0.1 * jax.random.normal(k2, (cin, cout, ksz[0], ksz[1]), dtype=jnp.float32)
        bias = 0.1 * jax.random.normal(k3, (cout,), dtype=jnp.float32)

        out = circular_conv_transpose2d(x, weight, bias, stride)
        out = jax.block_until_ready(out)

        ref = _reference_forward(x, weight, bias, stride)
        assert out.shape == ref.shape, (out.shape, ref.shape)
        err = float(jnp.max(jnp.abs(out - ref)))
        assert jnp.allclose(out, ref, atol=1e-4, rtol=1e-4), err

    print("KERNEL_OK")
</pallas_src>

<mosaic_0001>
module attributes {stable_mosaic.version = 11 : i64} {
  func.func @kernel(%arg0: i32, %arg1: i32, %arg2: memref<1x18x72xf32, #tpu.memory_space<vmem>>, %arg3: memref<3x72x128xf32, #tpu.memory_space<vmem>>, %arg4: memref<1x128xf32, #tpu.memory_space<vmem>>, %arg5: memref<1x16x128xf32, #tpu.memory_space<vmem>>) attributes {dimension_semantics = [#tpu.dimension_semantics<parallel>, #tpu.dimension_semantics<parallel>], iteration_bounds = array<i64: 2, 1>, scalar_prefetch = 0 : i64, scratch_operands = 0 : i64, tpu.core_type = #tpu.core_type<tc>, window_params = [{transform_indices = @transform_0, window_bounds = array<i64: 1, 18, 72>}, {pipeline_mode = #tpu.pipeline_mode<synchronous>, transform_indices = @transform_1, window_bounds = array<i64: 3, 72, 128>}, {pipeline_mode = #tpu.pipeline_mode<synchronous>, transform_indices = @transform_2, window_bounds = array<i64: 1, 128>}, {transform_indices = @transform_3, window_bounds = array<i64: 1, 16, 128>}]} {
    %c0 = arith.constant 0 : index
    %c0_0 = arith.constant 0 : index
    %0 = vector.load %arg4[%c0, %c0_0] : memref<1x128xf32, #tpu.memory_space<vmem>>, vector<1x128xf32>
    %1 = vector.shape_cast %0 : vector<1x128xf32> to vector<1x128xf32>
    %2 = vector.broadcast %1 : vector<1x128xf32> to vector<16x128xf32>
    %c0_1 = arith.constant 0 : index
    %c0_2 = arith.constant 0 : index
    %c0_3 = arith.constant 0 : index
    %3 = vector.load %arg2[%c0_1, %c0_2, %c0_3] : memref<1x18x72xf32, #tpu.memory_space<vmem>>, vector<1x16x72xf32>
    %4 = vector.shape_cast %3 : vector<1x16x72xf32> to vector<16x72xf32>
    %c0_4 = arith.constant 0 : index
    %c0_5 = arith.constant 0 : index
    %c0_6 = arith.constant 0 : index
    %5 = vector.load %arg3[%c0_4, %c0_5, %c0_6] : memref<3x72x128xf32, #tpu.memory_space<vmem>>, vector<1x72x128xf32>
    %6 = vector.shape_cast %5 : vector<1x72x128xf32> to vector<72x128xf32>
    %cst = arith.constant dense<0.000000e+00> : vector<16x128xf32>
    %7 = tpu.matmul %4, %6, %cst {dimension_numbers = #tpu.dot_dimension_numbers<[1], [0], [0], [1], [0, 0, 1, 1], [], []>} : vector<16x72xf32>, vector<72x128xf32>, vector<16x128xf32> -> vector<16x128xf32>
    %8 = arith.addf %2, %7 : vector<16x128xf32>
    %c0_7 = arith.constant 0 : index
    %c1 = arith.constant 1 : index
    %c0_8 = arith.constant 0 : index
    %9 = vector.load %arg2[%c0_7, %c1, %c0_8] : memref<1x18x72xf32, #tpu.memory_space<vmem>>, vector<1x16x72xf32>
    %10 = vector.shape_cast %9 : vector<1x16x72xf32> to vector<16x72xf32>
    %c1_9 = arith.constant 1 : index
    %c0_10 = arith.constant 0 : index
    %c0_11 = arith.constant 0 : index
    %11 = vector.load %arg3[%c1_9, %c0_10, %c0_11] : memref<3x72x128xf32, #tpu.memory_space<vmem>>, vector<1x72x128xf32>
    %12 = vector.shape_cast %11 : vector<1x72x128xf32> to vector<72x128xf32>
    %cst_12 = arith.constant dense<0.000000e+00> : vector<16x128xf32>
    %13 = tpu.matmul %10, %12, %cst_12 {dimension_numbers = #tpu.dot_dimension_numbers<[1], [0], [0], [1], [0, 0, 1, 1], [], []>} : vector<16x72xf32>, vector<72x128xf32>, vector<16x128xf32> -> vector<16x128xf32>
    %14 = arith.addf %8, %13 : vector<16x128xf32>
    %c0_13 = arith.constant 0 : index
    %c2 = arith.constant 2 : index
    %c0_14 = arith.constant 0 : index
    %15 = vector.load %arg2[%c0_13, %c2, %c0_14] : memref<1x18x72xf32, #tpu.memory_space<vmem>>, vector<1x16x72xf32>
    %16 = vector.shape_cast %15 : vector<1x16x72xf32> to vector<16x72xf32>
    %c2_15 = arith.constant 2 : index
    %c0_16 = arith.constant 0 : index
    %c0_17 = arith.constant 0 : index
    %17 = vector.load %arg3[%c2_15, %c0_16, %c0_17] : memref<3x72x128xf32, #tpu.memory_space<vmem>>, vector<1x72x128xf32>
    %18 = vector.shape_cast %17 : vector<1x72x128xf32> to vector<72x128xf32>
    %cst_18 = arith.constant dense<0.000000e+00> : vector<16x128xf32>
    %19 = tpu.matmul %16, %18, %cst_18 {dimension_numbers = #tpu.dot_dimension_numbers<[1], [0], [0], [1], [0, 0, 1, 1], [], []>} : vector<16x72xf32>, vector<72x128xf32>, vector<16x128xf32> -> vector<16x128xf32>
    %20 = arith.addf %14, %19 : vector<16x128xf32>
    %c0_19 = arith.constant 0 : index
    %c0_20 = arith.constant 0 : index
    %c0_21 = arith.constant 0 : index
    %21 = vector.load %arg5[%c0_19, %c0_20, %c0_21] : memref<1x16x128xf32, #tpu.memory_space<vmem>>, vector<1x16x128xf32>
    %22 = vector.shape_cast %21 : vector<1x16x128xf32> to vector<16x128xf32>
    %23 = vector.shape_cast %20 : vector<16x128xf32> to vector<1x16x128xf32>
    tpu.vector_store %arg5[%c0_19, %c0_20, %c0_21], %23 {strides = array<i32>} : memref<1x16x128xf32, #tpu.memory_space<vmem>>, vector<1x16x128xf32>,
    return
  }
  func.func @transform_0(%arg0: i32, %arg1: i32) -> (i32, i32, i32) {
    %c0_i32 = arith.constant 0 : i32
    %c0_i32_0 = arith.constant 0 : i32
    %c0_i32_1 = arith.constant 0 : i32
    return %arg0, %c0_i32, %c0_i32_0 : i32, i32, i32
  }
  func.func @transform_1(%arg0: i32, %arg1: i32) -> (i32, i32, i32) {
    %c0_i32 = arith.constant 0 : i32
    %c0_i32_0 = arith.constant 0 : i32
    %c0_i32_1 = arith.constant 0 : i32
    %c0_i32_2 = arith.constant 0 : i32
    return %c0_i32, %c0_i32_0, %c0_i32_1 : i32, i32, i32
  }
  func.func @transform_2(%arg0: i32, %arg1: i32) -> (i32, i32) {
    %c0_i32 = arith.constant 0 : i32
    %c0_i32_0 = arith.constant 0 : i32
    %c0_i32_1 = arith.constant 0 : i32
    return %c0_i32, %c0_i32_0 : i32, i32
  }
  func.func @transform_3(%arg0: i32, %arg1: i32) -> (i32, i32, i32) {
    %c0_i32 = arith.constant 0 : i32
    %c0_i32_0 = arith.constant 0 : i32
    return %arg0, %arg1, %c0_i32 : i32, i32, i32
  }
}

</mosaic_0001>

<llo_original>
// kernel: circular_conv_transpose2d.1
$region0: #{circular_conv_transpose2d.1}
  #allocation0 [shape = 'u32[]', space=smem, size = 0x4, offset = 0x4, fixed_abs, tag = 'smem constant byte address 0x4 - core index']
  #allocation1 [shape = 'u32[144,128]{1,0:T(1,128)}', space=vmem, size = 0x12000, scoped, tag = 'internal scratch']
  %s0 = inlined_call_operand.vmem [shape: f32[2,18,72], index: 0, kind: input, shape index: {}]
  %s1 = inlined_call_operand.vmem [shape: f32[3,72,128], index: 1, kind: input, shape index: {}]
  %s2 = inlined_call_operand.vmem [shape: f32[1,128], index: 2, kind: input, shape index: {}]
  %s3 = inlined_call_operand.vmem [shape: f32[2,16,128], index: 3, kind: output, shape index: {}]
  %s4 = sld [smem:[#allocation0]]
  $region45: #{circular_conv_transpose2d.1} parent=0
    _
  %s6 = ssub.s32 1, %s4
  %s7 = scalar_select 0, %s6, %s4
  loop: start=0, step=1, limit=4
  $region2: #{circular_conv_transpose2d.1} parent=0 // loop_pre_header
    _
  $region3: #{circular_conv_transpose2d.1} parent=0 // loop_header
    %s9 = sphi 0, %s13
    %p10 = scmp.ge.s32.totalorder %s9, 4
    %s16 = sphi 0, %s28
    %s17 = sphi 0, %s24
    %s18 = sphi 0, %s16
    %s19 = sphi 0, %s17
    %s20 = sphi 0, %s18
    %s21 = sphi 0, %s19
    %s31 = sphi 0, %s33
    %s34 = sphi 0, %s31
    %s35 = sphi 0, %s34
    %s51 = sphi 0, %s35
    %s55 = sphi 0, %s55
    %s57 = sphi 0, %s55
    %s58 = sphi 0, %s57
    %s72 = sphi 0, %s58
    %s76 = sphi 0, %s76
    %s78 = sphi 0, %s76
    %s79 = sphi 0, %s78
    %s93 = sphi 0, %s79
    %s101 = sphi 0, %s103
    %s104 = sphi 0, %s101
    %s105 = sphi 0, %s104
    %s121 = sphi 0, %s105
  $region4: #{circular_conv_transpose2d.1} parent=0 // loop_header_branch
    %12 = sbr.rel (%p10) target = $region8
  $region5: #{circular_conv_transpose2d.1} parent=0 // loop_body
    %s14 = ssub.s32 %s9, 1
    %s15 = ssub.s32 %s9, 2
    %s22 = sadd.s32 1, %s17
    %p23 = scmp.ge.s32.totalorder %s22, 1
    %s24 = scalar_select %p23, 0, %s22
    %s25 = sadd.s32 1, %s16
    %s26 = scalar_select %p23, %s25, %s16
    %p27 = scmp.ge.s32.totalorder %s26, 2
    %s28 = scalar_select %p27, 0, %s26
    %s29 = ssub.s32 %s16, %s28
    %p30 = scmp.eq.s32.totalorder %s29, 0
    %s32 = sadd.s32 %s31, 1
    %s33 = scalar_select %p30, %s31, %s32
    %p36 = pneg %p30
    %p37 = scmp.eq.s32.totalorder %s9, 1
    %p38 = por %p36, %p37
    %p39 = scmp.ne.s32.totalorder %s31, %s34
    %p40 = scmp.eq.s32.totalorder %s9, 0
    %p41 = por %p39, %p40
    %p42 = scmp.ne.s32.totalorder %s31, %s34
    %p43 = scmp.eq.s32.totalorder %s14, 1
    %p44 = por %p42, %p43
    %p45 = scmp.ne.s32.totalorder %s34, %s35
    %p46 = scmp.eq.s32.totalorder %s14, 0
    %p47 = por %p45, %p46
    %p48 = scmp.ne.s32.totalorder %s34, %s35
    %p49 = scmp.eq.s32.totalorder %s15, 1
    %p50 = por %p48, %p49
    %p52 = scmp.ne.s32.totalorder %s35, %s51
    %p53 = scmp.eq.s32.totalorder %s15, 0
    %p54 = por %p52, %p53
    %s56 = sadd.s32 %s55, 1
    %p59 = scmp.eq.s32.totalorder %s9, 1
    %p60 = scmp.ne.s32.totalorder %s55, %s57
    %p61 = scmp.eq.s32.totalorder %s9, 0
    %p62 = por %p60, %p61
    %p63 = scmp.ne.s32.totalorder %s55, %s57
    %p64 = scmp.eq.s32.totalorder %s14, 1
    %p65 = por %p63, %p64
    %p66 = scmp.ne.s32.totalorder %s57, %s58
    %p67 = scmp.eq.s32.totalorder %s14, 0
    %p68 = por %p66, %p67
    %p69 = scmp.ne.s32.totalorder %s57, %s58
    %p70 = scmp.eq.s32.totalorder %s15, 1
    %p71 = por %p69, %p70
    %p73 = scmp.ne.s32.totalorder %s58, %s72
    %p74 = scmp.eq.s32.totalorder %s15, 0
    %p75 = por %p73, %p74
    %s77 = sadd.s32 %s76, 1
    %p80 = scmp.eq.s32.totalorder %s9, 1
    %p81 = scmp.ne.s32.totalorder %s76, %s78
    %p82 = scmp.eq.s32.totalorder %s9, 0
    %p83 = por %p81, %p82
    %p84 = scmp.ne.s32.totalorder %s76, %s78
    %p85 = scmp.eq.s32.totalorder %s14, 1
    %p86 = por %p84, %p85
    %p87 = scmp.ne.s32.totalorder %s78, %s79
    %p88 = scmp.eq.s32.totalorder %s14, 0
    %p89 = por %p87, %p88
    %p90 = scmp.ne.s32.totalorder %s78, %s79
    %p91 = scmp.eq.s32.totalorder %s15, 1
    %p92 = por %p90, %p91
    %p94 = scmp.ne.s32.totalorder %s79, %s93
    %p95 = scmp.eq.s32.totalorder %s15, 0
    %p96 = por %p94, %p95
    %s97 = ssub.s32 %s16, %s28
    %s98 = ssub.s32 %s17, %s24
    %s99 = sor.u32 %s97, %s98
    %p100 = scmp.eq.s32.totalorder %s99, 0
    %s102 = sadd.s32 %s101, 1
    %s103 = scalar_select %p100, %s101, %s102
    %p106 = pneg %p100
    %p107 = scmp.eq.s32.totalorder %s9, 1
    %p108 = por %p106, %p107
    %p109 = scmp.ne.s32.totalorder %s101, %s104
    %p110 = scmp.eq.s32.totalorder %s9, 0
    %p111 = por %p109, %p110
    %p112 = scmp.ne.s32.totalorder %s101, %s104
    %p113 = scmp.eq.s32.totalorder %s14, 1
    %p114 = por %p112, %p113
    %p115 = scmp.ne.s32.totalorder %s104, %s105
    %p116 = scmp.eq.s32.totalorder %s14, 0
    %p117 = por %p115, %p116
    %p118 = scmp.ne.s32.totalorder %s104, %s105
    %p119 = scmp.eq.s32.totalorder %s15, 1
    %p120 = por %p118, %p119
    %p122 = scmp.ne.s32.totalorder %s105, %s121
    %p123 = scmp.eq.s32.totalorder %s15, 0
    %p124 = por %p122, %p123
    %p125 = scmp.le.s32.totalorder 1, %s9
    %p126 = scmp.lt.s32.totalorder %s9, 3
    %p127 = pnand %p125, %p126
    %p128 = pneg %p127
    // Predicated region
    $region9: #{circular_conv_transpose2d.1} parent=5 // pred_check
      _
    $region10: #{circular_conv_transpose2d.1} parent=5 // pred_check_branch
      %130 = sbr.rel (%p127) target = $region12
    $region11: #{circular_conv_transpose2d.1} parent=5 // pred_region
      %s131 = ssub.s32 %s9, 1
      // Predicated region
      $region13: #{circular_conv_transpose2d.1} parent=11 // pred_check
        %p132 = pneg %p68
      $region14: #{circular_conv_transpose2d.1} parent=11 // pred_check_branch
        %134 = sbr.rel (%p132) target = $region16
      $region15: #{circular_conv_transpose2d.1} parent=11 // pred_region
        _
      $region16: #{circular_conv_transpose2d.1} parent=11 // pred_fallthru
        _
      // Predicated region
      $region17: #{circular_conv_transpose2d.1} parent=11 // pred_check
        %p135 = pneg %p89
      $region18: #{circular_conv_transpose2d.1} parent=11 // pred_check_branch
        %137 = sbr.rel (%p135) target = $region20
      $region19: #{circular_conv_transpose2d.1} parent=11 // pred_region
        _
      $region20: #{circular_conv_transpose2d.1} parent=11 // pred_fallthru
        _
    $region12: #{circular_conv_transpose2d.1} parent=5 // pred_fallthru
      _
    %p138 = scmp.lt.s32.totalorder %s9, 2
    // Predicated region
    $region21: #{circular_conv_transpose2d.1} parent=5 // pred_check
      %p139 = pneg %p138
    $region22: #{circular_conv_transpose2d.1} parent=5 // pred_check_branch
      %141 = sbr.rel (%p139) target = $region24
    $region23: #{circular_conv_transpose2d.1} parent=5 // pred_region
      // Predicated region
      $region25: #{circular_conv_transpose2d.1} parent=23 // pred_check
        %p142 = pneg %p41
      $region26: #{circular_conv_transpose2d.1} parent=23 // pred_check_branch
        %144 = sbr.rel (%p142) target = $region28
      $region27: #{circular_conv_transpose2d.1} parent=23 // pred_region
        %p145 = scmp.lt.s32.totalorder %s16, 1
        %s146 = scalar_select %p145, %s16, 1
        %s147 = smul.addr %s146, 3
        %s148 = smul.addr %s147, 8
        %s149 = scalar_lea.vmem %s0, %s148
      $region28: #{circular_conv_transpose2d.1} parent=23 // pred_fallthru
        _
    $region24: #{circular_conv_transpose2d.1} parent=5 // pred_fallthru
      _
    %p150 = scmp.le.s32.totalorder 1, %s9
    %p151 = scmp.lt.s32.totalorder %s9, 3
    %p152 = pnand %p150, %p151
    %p153 = pneg %p152
    // Predicated region
    $region29: #{circular_conv_transpose2d.1} parent=5 // pred_check
      _
    $region30: #{circular_conv_transpose2d.1} parent=5 // pred_check_branch
      %155 = sbr.rel (%p152) target = $region32
    $region31: #{circular_conv_transpose2d.1} parent=5 // pred_region
      %s156 = ssub.s32 %s9, 1
      %p157 = scmp.lt.s32.totalorder %s18, 1
      %s158 = scalar_select %p157, %s18, 1
      %s159 = smul.addr %s158, 3
      %s160 = smul.addr %s159, 8
      %s161 = scalar_lea.vmem %s0, %s160
      %p162 = pneg %p47
      %p163 = pneg %p44
      %p164 = pneg %p68
      %p165 = pneg %p65
      %p166 = pneg %p89
      %p167 = pneg %p86
      %p168 = pneg %p117
      %p169 = pneg %p114
      %s170 = smul.u32 2, %s19
      %p171 = scmp.lt.s32.totalorder %s18, 1
      %s172 = scalar_select %p171, %s18, 1
      %p173 = scmp.lt.s32.totalorder %s170, 1
      %s174 = scalar_select %p173, %s170, 1
      %s175 = smul.addr %s172, 2
      %s176 = sadd.s32 %s174, %s175
      %s177 = smul.addr %s176, 8
      %s178 = scalar_lea.vmem %s3, %s177
      %p179 = scmp.lt.s32.totalorder %s18, 1
      %s180 = scalar_select %p179, %s18, 1
      %s181 = smul.addr %s180, 3
      %s182 = smul.addr %s181, 8
      %s183 = scalar_lea.vmem %s0, %s182
      %s184 = smul.u32 2, %s19
      %p185 = scmp.lt.s32.totalorder %s18, 1
      %s186 = scalar_select %p185, %s18, 1
      %p187 = scmp.lt.s32.totalorder %s184, 1
      %s188 = scalar_select %p187, %s184, 1
      %s189 = smul.addr %s186, 2
      %s190 = sadd.s32 %s188, %s189
      %s191 = smul.addr %s190, 8
      %s192 = scalar_lea.vmem %s3, %s191
      %s193 = smul.u32 2, %s19
      %v194 = vld [vmem:[%s2] sm:$0x1]
      %v196 = vlaneseq
      %v197 = vshrl.u32 %v196, 7
      %v198 = vsub.s32 0, %v197
      %v199 = vrot.slane %v194, %v198
      %v201 = vld [vmem:[%s183] sm:$0xff]
      %v202 = vld [vmem:[%s183 + $0x8] sm:$0xff]
      %v203 = vld [vmem:[%s1] sm:$0xff]
      %v204 = vld [vmem:[%s1 + $0x8] sm:$0xff]
      %v205 = vld [vmem:[%s1 + $0x10] sm:$0xff]
      %v206 = vld [vmem:[%s1 + $0x18] sm:$0xff]
      %v207 = vld [vmem:[%s1 + $0x20] sm:$0xff]
      %v208 = vld [vmem:[%s1 + $0x28] sm:$0xff]
      %v209 = vld [vmem:[%s1 + $0x30] sm:$0xff]
      %v210 = vld [vmem:[%s1 + $0x38] sm:$0xff]
      %v211 = vld [vmem:[%s1 + $0x40] sm:$0xff]
      %vm212 = vcmask 588800
      %v214 = vsel %vm212, %v201, 0
      %v217 = vsel %vm212, %v202, 0
      %219 = vmatprep.subr.mxu0 0.0
      %220 = vmatpush1.msra.mxu0 0.0
      %221 = vmatprep.subr.mxu0 0.0
      %222 = vmatpush1.msra.mxu0 0.0
      %223 = vmatprep.subr.mxu0 0.0
      %224 = vmatpush1.msra.mxu0 0.0
      %225 = vmatprep.subr.mxu0 0.0
      %226 = vmatpush1.msra.mxu0 0.0
      %227 = vmatprep.subr.mxu0 0.0
      %228 = vmatpush1.msra.mxu0 0.0
      %229 = vmatprep.subr.mxu0 0.0
      %230 = vmatpush1.msra.mxu0 0.0
      %231 = vmatprep.subr.mxu0 0.0
      %232 = vmatpush1.msra.mxu0 0.0
      %233 = vmatprep.subr.mxu0 0.0
      %234 = vmatpush1.msra.mxu0 %v211
      %235 = vmatprep.subr.mxu0 0.0
      %236 = vmatpush1.msra.mxu0 %v210
      %237 = vmatprep.subr.mxu0 0.0
      %238 = vmatpush1.msra.mxu0 %v209
      %239 = vmatprep.subr.mxu0 0.0
      %240 = vmatpush1.msra.mxu0 %v208
      %241 = vmatprep.subr.mxu0 0.0
      %242 = vmatpush1.msra.mxu0 %v207
      %243 = vmatprep.subr.mxu0 0.0
      %244 = vmatpush1.msra.mxu0 %v206
      %245 = vmatprep.subr.mxu0 0.0
      %246 = vmatpush1.msra.mxu0 %v205
      %247 = vmatprep.subr.mxu0 0.0
      %248 = vmatpush1.msra.mxu0 %v204
      %249 = vmatprep.subr.mxu0 0.0
      %250 = vmatpush1.msra.mxu0 %v203
      %251 = vmatprep.subr.mxu0 0.0
      %252 = vmatpush2.msra.mxu0 0.0
      %253 = vmatprep.subr.mxu0 0.0
      %254 = vmatpush2.msra.mxu0 0.0
      %255 = vmatprep.subr.mxu0 0.0
      %256 = vmatpush2.msra.mxu0 0.0
      %257 = vmatprep.subr.mxu0 0.0
      %258 = vmatpush2.msra.mxu0 0.0
      %259 = vmatprep.subr.mxu0 0.0
      %260 = vmatpush2.msra.mxu0 0.0
      %261 = vmatprep.subr.mxu0 0.0
      %262 = vmatpush2.msra.mxu0 0.0
      %263 = vmatprep.subr.mxu0 0.0
      %264 = vmatpush2.msra.mxu0 0.0
      %265 = vmatprep.subr.mxu0 0.0
      %266 = vmatpush2.msra.mxu0 0.0
      %267 = vmatprep.subr.mxu0 0.0
      %268 = vmatpush2.msra.mxu0 0.0
      %269 = vmatprep.subr.mxu0 0.0
      %270 = vmatpush2.msra.mxu0 0.0
      %271 = vmatprep.subr.mxu0 0.0
      %272 = vmatpush2.msra.mxu0 0.0
      %273 = vmatprep.subr.mxu0 0.0
      %274 = vmatpush2.msra.mxu0 0.0
      %275 = vmatprep.subr.mxu0 0.0
      %276 = vmatpush2.msra.mxu0 0.0
      %277 = vmatprep.subr.mxu0 0.0
      %278 = vmatpush2.msra.mxu0 0.0
      %279 = vmatprep.subr.mxu0 0.0
      %280 = vmatpush2.msra.mxu0 0.0
      %281 = vmatprep.subr.mxu0 0.0
      %282 = vmatpush2.msra.mxu0 0.0
      %283 = vmatprep.mubr.f32.mxu0 0.0
      %284 = vmatmul.mubr.f32.gmra.mxu0 %v214
      %v285 = vpop.f32.mrf.mxu0
      %v286 = vadd.f32 0.0, %v285
      %v287 = vpop.f32.mrf.mxu0
      %288 = vmatprep.mubr.f32.mxu0 0.0
      %289 = vmatmul.mubr.f32.gmra.mxu0 %v217
      %v290 = vpop.f32.mrf.mxu0
      %v291 = vadd.f32 0.0, %v290
      %v292 = vpop.f32.mrf.mxu0
      %293 = vdwg.mxu0
      %v294 = vadd.f32 %v199, %v286
      %v295 = vadd.f32 %v199, %v291
      %v296 = vld [vmem:[%s183 + $0x1] sm:$0xff]
      %v297 = vld [vmem:[%s183 + $0x9] sm:$0xff]
      %s298 = scalar_lea.vmem %s1, 72
      %v299 = vld [vmem:[%s298] sm:$0xff]
      %v300 = vld [vmem:[%s298 + $0x8] sm:$0xff]
      %v301 = vld [vmem:[%s298 + $0x10] sm:$0xff]
      %v302 = vld [vmem:[%s298 + $0x18] sm:$0xff]
      %v303 = vld [vmem:[%s298 + $0x20] sm:$0xff]
      %v304 = vld [vmem:[%s298 + $0x28] sm:$0xff]
      %v305 = vld [vmem:[%s298 + $0x30] sm:$0xff]
      %v306 = vld [vmem:[%s298 + $0x38] sm:$0xff]
      %v307 = vld [vmem:[%s298 + $0x40] sm:$0xff]
      %v309 = vsel %vm212, %v296, 0
      %v312 = vsel %vm212, %v297, 0
      %314 = vmatprep.subr.mxu0 0.0
      %315 = vmatpush1.msra.mxu0 0.0
      %316 = vmatprep.subr.mxu0 0.0
      %317 = vmatpush1.msra.mxu0 0.0
      %318 = vmatprep.subr.mxu0 0.0
      %319 = vmatpush1.msra.mxu0 0.0
      %320 = vmatprep.subr.mxu0 0.0
      %321 = vmatpush1.msra.mxu0 0.0
      %322 = vmatprep.subr.mxu0 0.0
      %323 = vmatpush1.msra.mxu0 0.0
      %324 = vmatprep.subr.mxu0 0.0
      %325 = vmatpush1.msra.mxu0 0.0
      %326 = vmatprep.subr.mxu0 0.0
      %327 = vmatpush1.msra.mxu0 0.0
      %328 = vmatprep.subr.mxu0 0.0
      %329 = vmatpush1.msra.mxu0 %v307
      %330 = vmatprep.subr.mxu0 0.0
      %331 = vmatpush1.msra.mxu0 %v306
      %332 = vmatprep.subr.mxu0 0.0
      %333 = vmatpush1.msra.mxu0 %v305
      %334 = vmatprep.subr.mxu0 0.0
      %335 = vmatpush1.msra.mxu0 %v304
      %336 = vmatprep.subr.mxu0 0.0
      %337 = vmatpush1.msra.mxu0 %v303
      %338 = vmatprep.subr.mxu0 0.0
      %339 = vmatpush1.msra.mxu0 %v302
      %340 = vmatprep.subr.mxu0 0.0
      %341 = vmatpush1.msra.mxu0 %v301
      %342 = vmatprep.subr.mxu0 0.0
      %343 = vmatpush1.msra.mxu0 %v300
      %344 = vmatprep.subr.mxu0 0.0
      %345 = vmatpush1.msra.mxu0 %v299
      %346 = vmatprep.subr.mxu0 0.0
      %347 = vmatpush2.msra.mxu0 0.0
      %348 = vmatprep.subr.mxu0 0.0
      %349 = vmatpush2.msra.mxu0 0.0
      %350 = vmatprep.subr.mxu0 0.0
      %351 = vmatpush2.msra.mxu0 0.0
      %352 = vmatprep.subr.mxu0 0.0
      %353 = vmatpush2.msra.mxu0 0.0
      %354 = vmatprep.subr.mxu0 0.0
      %355 = vmatpush2.msra.mxu0 0.0
      %356 = vmatprep.subr.mxu0 0.0
      %357 = vmatpush2.msra.mxu0 0.0
      %358 = vmatprep.subr.mxu0 0.0
      %359 = vmatpush2.msra.mxu0 0.0
      %360 = vmatprep.subr.mxu0 0.0
      %361 = vmatpush2.msra.mxu0 0.0
      %362 = vmatprep.subr.mxu0 0.0
      %363 = vmatpush2.msra.mxu0 0.0
      %364 = vmatprep.subr.mxu0 0.0
      %365 = vmatpush2.msra.mxu0 0.0
      %366 = vmatprep.subr.mxu0 0.0
      %367 = vmatpush2.msra.mxu0 0.0
      %368 = vmatprep.subr.mxu0 0.0
      %369 = vmatpush2.msra.mxu0 0.0
      %370 = vmatprep.subr.mxu0 0.0
      %371 = vmatpush2.msra.mxu0 0.0
      %372 = vmatprep.subr.mxu0 0.0
      %373 = vmatpush2.msra.mxu0 0.0
      %374 = vmatprep.subr.mxu0 0.0
      %375 = vmatpush2.msra.mxu0 0.0
      %376 = vmatprep.subr.mxu0 0.0
      %377 = vmatpush2.msra.mxu0 0.0
      %378 = vmatprep.mubr.f32.mxu0 0.0
      %379 = vmatmul.mubr.f32.gmra.mxu0 %v309
      %v380 = vpop.f32.mrf.mxu0
      %v381 = vadd.f32 0.0, %v380
      %v382 = vpop.f32.mrf.mxu0
      %383 = vmatprep.mubr.f32.mxu0 0.0
      %384 = vmatmul.mubr.f32.gmra.mxu0 %v312
      %v385 = vpop.f32.mrf.mxu0
      %v386 = vadd.f32 0.0, %v385
      %v387 = vpop.f32.mrf.mxu0
      %388 = vdwg.mxu0
      %v389 = vadd.f32 %v294, %v381
      %v390 = vadd.f32 %v295, %v386
      %v391 = vld [vmem:[%s183 + $0x2] sm:$0xff]
      %v392 = vld [vmem:[%s183 + $0xa] sm:$0xff]
      %s393 = scalar_lea.vmem %s1, 144
      %v394 = vld [vmem:[%s393] sm:$0xff]
      %v395 = vld [vmem:[%s393 + $0x8] sm:$0xff]
      %v396 = vld [vmem:[%s393 + $0x10] sm:$0xff]
      %v397 = vld [vmem:[%s393 + $0x18] sm:$0xff]
      %v398 = vld [vmem:[%s393 + $0x20] sm:$0xff]
      %v399 = vld [vmem:[%s393 + $0x28] sm:$0xff]
      %v400 = vld [vmem:[%s393 + $0x30] sm:$0xff]
      %v401 = vld [vmem:[%s393 + $0x38] sm:$0xff]
      %v402 = vld [vmem:[%s393 + $0x40] sm:$0xff]
      %v404 = vsel %vm212, %v391, 0
      %v407 = vsel %vm212, %v392, 0
      %409 = vmatprep.subr.mxu0 0.0
      %410 = vmatpush1.msra.mxu0 0.0
      %411 = vmatprep.subr.mxu0 0.0
      %412 = vmatpush1.msra.mxu0 0.0
      %413 = vmatprep.subr.mxu0 0.0
      %414 = vmatpush1.msra.mxu0 0.0
      %415 = vmatprep.subr.mxu0 0.0
      %416 = vmatpush1.msra.mxu0 0.0
      %417 = vmatprep.subr.mxu0 0.0
      %418 = vmatpush1.msra.mxu0 0.0
      %419 = vmatprep.subr.mxu0 0.0
      %420 = vmatpush1.msra.mxu0 0.0
      %421 = vmatprep.subr.mxu0 0.0
      %422 = vmatpush1.msra.mxu0 0.0
      %423 = vmatprep.subr.mxu0 0.0
      %424 = vmatpush1.msra.mxu0 %v402
      %425 = vmatprep.subr.mxu0 0.0
      %426 = vmatpush1.msra.mxu0 %v401
      %427 = vmatprep.subr.mxu0 0.0
      %428 = vmatpush1.msra.mxu0 %v400
      %429 = vmatprep.subr.mxu0 0.0
      %430 = vmatpush1.msra.mxu0 %v399
      %431 = vmatprep.subr.mxu0 0.0
      %432 = vmatpush1.msra.mxu0 %v398
      %433 = vmatprep.subr.mxu0 0.0
      %434 = vmatpush1.msra.mxu0 %v397
      %435 = vmatprep.subr.mxu0 0.0
      %436 = vmatpush1.msra.mxu0 %v396
      %437 = vmatprep.subr.mxu0 0.0
      %438 = vmatpush1.msra.mxu0 %v395
      %439 = vmatprep.subr.mxu0 0.0
      %440 = vmatpush1.msra.mxu0 %v394
      %441 = vmatprep.subr.mxu0 0.0
      %442 = vmatpush2.msra.mxu0 0.0
      %443 = vmatprep.subr.mxu0 0.0
      %444 = vmatpush2.msra.mxu0 0.0
      %445 = vmatprep.subr.mxu0 0.0
      %446 = vmatpush2.msra.mxu0 0.0
      %447 = vmatprep.subr.mxu0 0.0
      %448 = vmatpush2.msra.mxu0 0.0
      %449 = vmatprep.subr.mxu0 0.0
      %450 = vmatpush2.msra.mxu0 0.0
      %451 = vmatprep.subr.mxu0 0.0
      %452 = vmatpush2.msra.mxu0 0.0
      %453 = vmatprep.subr.mxu0 0.0
      %454 = vmatpush2.msra.mxu0 0.0
      %455 = vmatprep.subr.mxu0 0.0
      %456 = vmatpush2.msra.mxu0 0.0
      %457 = vmatprep.subr.mxu0 0.0
      %458 = vmatpush2.msra.mxu0 0.0
      %459 = vmatprep.subr.mxu0 0.0
      %460 = vmatpush2.msra.mxu0 0.0
      %461 = vmatprep.subr.mxu0 0.0
      %462 = vmatpush2.msra.mxu0 0.0
      %463 = vmatprep.subr.mxu0 0.0
      %464 = vmatpush2.msra.mxu0 0.0
      %465 = vmatprep.subr.mxu0 0.0
      %466 = vmatpush2.msra.mxu0 0.0
      %467 = vmatprep.subr.mxu0 0.0
      %468 = vmatpush2.msra.mxu0 0.0
      %469 = vmatprep.subr.mxu0 0.0
      %470 = vmatpush2.msra.mxu0 0.0
      %471 = vmatprep.subr.mxu0 0.0
      %472 = vmatpush2.msra.mxu0 0.0
      %473 = vmatprep.mubr.f32.mxu0 0.0
      %474 = vmatmul.mubr.f32.gmra.mxu0 %v404
      %v475 = vpop.f32.mrf.mxu0
      %v476 = vadd.f32 0.0, %v475
      %v477 = vpop.f32.mrf.mxu0
      %478 = vmatprep.mubr.f32.mxu0 0.0
      %479 = vmatmul.mubr.f32.gmra.mxu0 %v407
      %v480 = vpop.f32.mrf.mxu0
      %v481 = vadd.f32 0.0, %v480
      %v482 = vpop.f32.mrf.mxu0
      %483 = vdwg.mxu0
      %v484 = vadd.f32 %v389, %v476
      %v485 = vadd.f32 %v390, %v481
      %486 = vst [vmem:[%s192] sm:$0xff] %v484
      %487 = vst [vmem:[%s192 + $0x8] sm:$0xff] %v485
      %s488 = smul.u32 2, %s19
      %p489 = scmp.lt.s32.totalorder %s18, 1
      %s490 = scalar_select %p489, %s18, 1
      %p491 = scmp.lt.s32.totalorder %s488, 1
      %s492 = scalar_select %p491, %s488, 1
      %s493 = smul.addr %s490, 2
      %s494 = sadd.s32 %s492, %s493
      %s495 = smul.addr %s494, 8
      %s496 = scalar_lea.vmem %s3, %s495
      // Predicated region
      $region33: #{circular_conv_transpose2d.1} parent=31 // pred_check
        %p497 = pneg %p114
      $region34: #{circular_conv_transpose2d.1} parent=31 // pred_check_branch
        %499 = sbr.rel (%p497) target = $region36
      $region35: #{circular_conv_transpose2d.1} parent=31 // pred_region
        %s500 = smul.u32 2, %s19
      $region36: #{circular_conv_transpose2d.1} parent=31 // pred_fallthru
        _
    $region32: #{circular_conv_transpose2d.1} parent=5 // pred_fallthru
      _
    %p501 = scmp.le.s32.totalorder 2, %s9
    // Predicated region
    $region37: #{circular_conv_transpose2d.1} parent=5 // pred_check
      %p502 = pneg %p501
    $region38: #{circular_conv_transpose2d.1} parent=5 // pred_check_branch
      %504 = sbr.rel (%p502) target = $region40
    $region39: #{circular_conv_transpose2d.1} parent=5 // pred_region
      %s505 = ssub.s32 %s9, 2
      // Predicated region
      $region41: #{circular_conv_transpose2d.1} parent=39 // pred_check
        %p506 = pneg %p120
      $region42: #{circular_conv_transpose2d.1} parent=39 // pred_check_branch
        %508 = sbr.rel (%p506) target = $region44
      $region43: #{circular_conv_transpose2d.1} parent=39 // pred_region
        %s509 = smul.u32 2, %s21
        %p510 = scmp.lt.s32.totalorder %s20, 1
        %s511 = scalar_select %p510, %s20, 1
        %p512 = scmp.lt.s32.totalorder %s509, 1
        %s513 = scalar_select %p512, %s509, 1
        %s514 = smul.addr %s511, 2
        %s515 = sadd.s32 %s513, %s514
        %s516 = smul.addr %s515, 8
        %s517 = scalar_lea.vmem %s3, %s516
      $region44: #{circular_conv_transpose2d.1} parent=39 // pred_fallthru
        _
    $region40: #{circular_conv_transpose2d.1} parent=5 // pred_fallthru
      _
  $region6: #{circular_conv_transpose2d.1} parent=0 // loop_footer
    %s13 = sadd.s32 1, %s9
  $region7: #{circular_conv_transpose2d.1} parent=0 // loop_footer_branch
    %8 = sbr.rel target = $region3
  $region8: #{circular_conv_transpose2d.1} parent=0 // loop_exit
    _

</llo_original>
